<compile_context>
chip_gen: v7x
topology: tpu7x:2x2x1
jax: 0.10.0
libtpu: 0.0.40
codegen_flags: <defaults>
</compile_context>

<pallas_src>
import functools

import jax
import jax.numpy as jnp
from jax.experimental import pallas as pl
from jax.experimental.pallas import tpu as pltpu


_F32_TEMPS = 6  # ~live tile-sized f32 intermediates materialized per grid step


def _round_up(x, m):
    return -(-x // m) * m


def _round_down(x, m):
    return (x // m) * m


def _int_pow(x, n):
    """x**n for a small positive int n via a VPU multiply chain."""
    acc = x
    for _ in range(n - 1):
        acc = acc * x
    return acc


def _half_pow(x, sqrt_x, two_e):
    """x ** (two_e / 2) for a small positive int two_e, reusing sqrt_x."""
    e_int, odd = divmod(two_e, 2)
    out = None
    if e_int >= 1:
        out = _int_pow(x, e_int)
    if odd:
        out = sqrt_x if out is None else out * sqrt_x
    return out


def _ttm_kernel(y_s_ref, y_t_ref, out_ref, *, alpha, beta, l, batch,
                mask_rows, mode):
    tb = y_s_ref.shape[0]
    ys = y_s_ref[...].astype(jnp.float32)                 # [tb, C]
    yt = y_t_ref[...].astype(jnp.float32)                 # [tb, C]

    # Shifted logits; yt_sh already carries the temperature exponent `l`, so
    #   et = exp(yt_sh) is the unnormalized tempered teacher softmax(y_t)**l.
    ys_sh = ys - jnp.max(ys, axis=-1, keepdims=True)      # <= 0
    yt_sh = l * (yt - jnp.max(yt, axis=-1, keepdims=True))
    es = jnp.exp(ys_sh)                                    # unnormalized p_s
    et = jnp.exp(yt_sh)                                    # unnormalized p_t
    zs = jnp.sum(es, axis=-1, keepdims=True)               # [tb, 1]
    zt = jnp.sum(et, axis=-1, keepdims=True)               # [tb, 1]

    if mode == "kl":
        # KL(p_t || p_s) = sum p_t*(log p_t - log p_s)
        #   = (1/zt)*sum(et*(yt_sh - ys_sh)) + log zs - log zt  (per-row logs only)
        inv_zt = pl.reciprocal(zt, approx=False)           # exact; [tb,1] so free
        loss_rows = (inv_zt * jnp.sum(et * (yt_sh - ys_sh), axis=-1, keepdims=True)
                     + jnp.log(zs) - jnp.log(zt))
    elif mode == "half_int":
        # alpha, beta, alpha+beta are half-integers (default 2, 0.5, 2.5):
        # every p**x becomes an integer multiply chain + one shared sqrt.
        ab = alpha + beta
        two_a = int(round(2.0 * alpha))
        two_b = int(round(2.0 * beta))
        two_ab = int(round(2.0 * ab))
        p_t = et * pl.reciprocal(zt, approx=False)
        p_s = es * pl.reciprocal(zs, approx=False)
        sqrt_pt = jnp.sqrt(p_t) if (two_ab % 2 or two_a % 2) else None
        sqrt_ps = jnp.sqrt(p_s) if (two_ab % 2 or two_b % 2) else None
        t1 = (1.0 / (beta * ab)) * jnp.sum(
            _half_pow(p_t, sqrt_pt, two_ab), axis=-1, keepdims=True)
        t2 = (1.0 / (alpha * ab)) * jnp.sum(
            _half_pow(p_s, sqrt_ps, two_ab), axis=-1, keepdims=True)
        t3 = (-1.0 / (alpha * beta)) * jnp.sum(
            _half_pow(p_t, sqrt_pt, two_a) * _half_pow(p_s, sqrt_ps, two_b),
            axis=-1, keepdims=True)
        loss_rows = t1 + t2 + t3
    else:
        # General alpha-beta: fold normalizers into per-row scalars so no
        # full-tile log-softmax is materialized:
        #   p**x = exp(x * shifted) * z**(-x),  z**(-x) = exp(-x * log z) (per-row)
        ab = alpha + beta
        log_zs = jnp.log(zs)
        log_zt = jnp.log(zt)
        t1 = ((1.0 / (beta * ab)) * jnp.exp(-ab * log_zt)
              * jnp.sum(jnp.exp(ab * yt_sh), axis=-1, keepdims=True))
        t2 = ((1.0 / (alpha * ab)) * jnp.exp(-ab * log_zs)
              * jnp.sum(jnp.exp(ab * ys_sh), axis=-1, keepdims=True))
        t3 = ((-1.0 / (alpha * beta)) * jnp.exp(-alpha * log_zt - beta * log_zs)
              * jnp.sum(jnp.exp(alpha * yt_sh + beta * ys_sh),
                        axis=-1, keepdims=True))
        loss_rows = t1 + t2 + t3

    if mask_rows:
        # Padded tail rows carry undefined data: zero them BEFORE the tile sum.
        row = (pl.program_id(0) * tb
               + jax.lax.broadcasted_iota(jnp.int32, (tb, 1), 0))
        loss_rows = jnp.where(row < batch, loss_rows, 0.0)

    tile_sum = jnp.sum(loss_rows, axis=0, keepdims=True)           # [1, 1]
    out_ref[...] = jnp.broadcast_to(tile_sum, out_ref.shape).astype(out_ref.dtype)


def ttm_loss(y_s, y_t, target=None, epoch=None, *,
             alpha=2.0, beta=0.5, gamma=1.0, l=2.0, block_rows=None):
    """Pallas implementation of TTM.forward. `target`/`epoch`/`gamma` are
    accepted for API parity but unused (same as the PyTorch forward)."""
    del target, epoch, gamma
    alpha = float(alpha)
    beta = float(beta)
    l = float(l)
    B, C = y_s.shape

    is_kl = (alpha == 1.0 and beta == 0.0)
    if not is_kl and (alpha == 0.0 or beta == 0.0 or (alpha + beta) == 0.0):
        raise ValueError(
            "TTM general branch requires alpha != 0, beta != 0 and "
            "alpha + beta != 0 (use alpha=1, beta=0 for the KL branch).")

    def _near_int(x):
        return abs(x - round(x)) < 1e-9

    if is_kl:
        mode = "kl"
    elif (alpha > 0.0 and beta > 0.0
          and _near_int(2.0 * alpha) and _near_int(2.0 * beta)
          and _near_int(2.0 * (alpha + beta))
          and round(2.0 * (alpha + beta)) <= 8):
        mode = "half_int"
    else:
        mode = "general"

    itemsize = jnp.dtype(y_s.dtype).itemsize
    # Row-packing multiple for the wire dtype: 8 (f32), 16 (bf16), 32 (int8/fp8).
    pack = max(8, 32 // max(1, itemsize))

    try:
        phys_vmem = int(pltpu.get_tpu_info().vmem_capacity_bytes)
    except Exception:
        phys_vmem = 64 * 1024 * 1024          # conservative: v7x per-TC VMEM
    budget = int(0.70 * phys_vmem)            # data-footprint target w/ headroom

    # Per-row VMEM bytes per grid step: double-buffered inputs + f32 temps.
    bytes_per_row = 4 * C * itemsize + _F32_TEMPS * 4 * C
    if block_rows is None:
        block_rows = budget // max(1, bytes_per_row)
        block_rows = max(pack, min(4096, _round_down(block_rows, pack)))
    else:
        block_rows = max(8, _round_down(int(block_rows), 8))

    if B > pack:
        # Guarantee >= 2 grid steps so both v7x TensorCores get work and the
        # BlockSpec pipeline has something to prefetch.
        half = _round_up(_round_up(B, 2) // 2, pack)
        tb = max(8, _round_down(min(block_rows, half), 8))
    else:
        tb = B                                 # full batch dim: always a legal block
    num_tiles = _round_up(B, tb) // tb
    mask_rows = (num_tiles * tb != B)

    footprint = tb * bytes_per_row + (1 << 20)
    vmem_limit = max(32 << 20,
                     min(int(0.85 * phys_vmem), footprint + (16 << 20)))

    kernel = functools.partial(
        _ttm_kernel, alpha=alpha, beta=beta, l=l, batch=B,
        mask_rows=mask_rows, mode=mode)

    n_elems = B * C
    trans_per_elem = {"kl": 2, "half_int": 4, "general": 5}[mode]
    cost = pl.CostEstimate(
        flops=12 * n_elems,
        transcendentals=trans_per_elem * n_elems,
        bytes_accessed=2 * n_elems * itemsize + num_tiles * 128 * 4,
    )

    partials = pl.pallas_call(
        kernel,
        out_shape=jax.ShapeDtypeStruct((num_tiles, 128), jnp.float32),
        grid=(num_tiles,),
        in_specs=[
            pl.BlockSpec((tb, C), lambda i: (i, 0)),
            pl.BlockSpec((tb, C), lambda i: (i, 0)),
        ],
        out_specs=pl.BlockSpec((1, 128), lambda i: (i, 0)),
        compiler_params=pltpu.CompilerParams(
            dimension_semantics=("parallel",),
            vmem_limit_bytes=int(vmem_limit),
        ),
        cost_estimate=cost,
    )(y_s, y_t)

    # All 128 lanes of every per-tile row hold the same partial sum -> dense
    # reduction over the whole (num_tiles, 128) slab, divided by 128*B.
    return jnp.sum(partials) * (1.0 / (128.0 * B))


def _ttm_loss_ref(y_s, y_t, *, alpha, beta, l):
    """Pure-JAX reference (mirrors the PyTorch module) for correctness."""
    y_s = y_s.astype(jnp.float32)
    y_t = y_t.astype(jnp.float32)
    p_s = jax.nn.softmax(y_s, axis=1)
    p_t = jax.nn.softmax(y_t, axis=1) ** l
    p_t = p_t / jnp.sum(p_t, axis=1, keepdims=True)
    if alpha == 1 and beta == 0:
        log_p_s = jax.nn.log_softmax(y_s, axis=1)
        log_p_t = jnp.log(p_t)
        kl = jnp.where(p_t > 0, p_t * (log_p_t - log_p_s), 0.0)
        return jnp.mean(jnp.sum(kl, axis=1))
    ab = alpha + beta
    t1 = (1.0 / (beta * ab)) * jnp.sum(p_t ** ab, axis=1)
    t2 = (1.0 / (alpha * ab)) * jnp.sum(p_s ** ab, axis=1)
    t3 = (-1.0 / (alpha * beta)) * jnp.sum((p_t ** alpha) * (p_s ** beta), axis=1)
    return jnp.mean(t1 + t2 + t3)


if __name__ == "__main__":
    key = jax.random.PRNGKey(0)
    k1, k2, k3, k4, k5, k6 = jax.random.split(key, 6)

    B, C = 8, 128
    y_s = jax.random.normal(k1, (B, C), dtype=jnp.float32)
    y_t = jax.random.normal(k2, (B, C), dtype=jnp.float32)
    target = jnp.zeros((B,), dtype=jnp.int32)   # unused by forward
    epoch = 0                                   # unused by forward

    # Default half-integer alpha-beta divergence (opt.ab_alpha=2, ab_beta=0.5, ttm_l=2).
    loss_ab = ttm_loss(y_s, y_t, target, epoch, alpha=2.0, beta=0.5, gamma=1.0, l=2.0)
    jax.block_until_ready(loss_ab)
    ref_ab = _ttm_loss_ref(y_s, y_t, alpha=2.0, beta=0.5, l=2.0)
    assert jnp.allclose(loss_ab, ref_ab, rtol=1e-4, atol=1e-5), (loss_ab, ref_ab)

    # (alpha == 1, beta == 0) -> tempered KL divergence branch.
    loss_kl = ttm_loss(y_s, y_t, target, epoch, alpha=1.0, beta=0.0, gamma=1.0, l=2.0)
    jax.block_until_ready(loss_kl)
    ref_kl = _ttm_loss_ref(y_s, y_t, alpha=1.0, beta=0.0, l=2.0)
    assert jnp.allclose(loss_kl, ref_kl, rtol=1e-3, atol=1e-4), (loss_kl, ref_kl)

    # Non-half-integer alpha/beta -> general folded-normalizer branch.
    loss_g = ttm_loss(y_s, y_t, alpha=1.5, beta=0.7, l=2.0)
    jax.block_until_ready(loss_g)
    ref_g = _ttm_loss_ref(y_s, y_t, alpha=1.5, beta=0.7, l=2.0)
    assert jnp.allclose(loss_g, ref_g, rtol=1e-4, atol=1e-5), (loss_g, ref_g)

    # Tiled + padded batch: exercises the multi-step grid, parallel partials
    # and the tail-row mask.
    B2, C2 = 24, 128
    y_s2 = jax.random.normal(k3, (B2, C2), dtype=jnp.float32)
    y_t2 = jax.random.normal(k4, (B2, C2), dtype=jnp.float32)
    loss_t = ttm_loss(y_s2, y_t2, alpha=2.0, beta=0.5, l=2.0, block_rows=16)
    jax.block_until_ready(loss_t)
    ref_t = _ttm_loss_ref(y_s2, y_t2, alpha=2.0, beta=0.5, l=2.0)
    assert jnp.allclose(loss_t, ref_t, rtol=1e-4, atol=1e-5), (loss_t, ref_t)

    # Auto tiling: batch large enough to auto-split into the >=2-step grid.
    B3, C3 = 64, 256
    y_s3 = jax.random.normal(k5, (B3, C3), dtype=jnp.float32)
    y_t3 = jax.random.normal(k6, (B3, C3), dtype=jnp.float32)
    loss_a = ttm_loss(y_s3, y_t3, alpha=2.0, beta=0.5, l=2.0)
    jax.block_until_ready(loss_a)
    ref_a = _ttm_loss_ref(y_s3, y_t3, alpha=2.0, beta=0.5, l=2.0)
    assert jnp.allclose(loss_a, ref_a, rtol=1e-4, atol=1e-5), (loss_a, ref_a)

    # bf16 logits on the wire, f32 compute inside the kernel only.
    loss_bf = ttm_loss(y_s.astype(jnp.bfloat16), y_t.astype(jnp.bfloat16),
                       alpha=2.0, beta=0.5, l=2.0)
    jax.block_until_ready(loss_bf)
    ref_bf = _ttm_loss_ref(y_s.astype(jnp.bfloat16), y_t.astype(jnp.bfloat16),
                           alpha=2.0, beta=0.5, l=2.0)
    assert jnp.allclose(loss_bf, ref_bf, rtol=1e-3, atol=1e-3), (loss_bf, ref_bf)

    print("KERNEL_OK")
</pallas_src>

<mosaic_0001>
module attributes {stable_mosaic.version = 11 : i64} {
  func.func @_ttm_kernel(%arg0: i32, %arg1: memref<8x128xf32, #tpu.memory_space<vmem>>, %arg2: memref<8x128xf32, #tpu.memory_space<vmem>>, %arg3: memref<1x128xf32, #tpu.memory_space<vmem>>) attributes {dimension_semantics = [#tpu.dimension_semantics<parallel>], iteration_bounds = array<i64: 1>, scalar_prefetch = 0 : i64, scratch_operands = 0 : i64, tpu.core_type = #tpu.core_type<tc>, window_params = [{transform_indices = @transform_0, window_bounds = array<i64: 8, 128>}, {transform_indices = @transform_1, window_bounds = array<i64: 8, 128>}, {transform_indices = @transform_2, window_bounds = array<i64: 1, 128>}]} {
    %c0 = arith.constant 0 : index
    %c0_0 = arith.constant 0 : index
    %0 = vector.load %arg1[%c0, %c0_0] : memref<8x128xf32, #tpu.memory_space<vmem>>, vector<8x128xf32>
    %c0_1 = arith.constant 0 : index
    %c0_2 = arith.constant 0 : index
    %1 = vector.load %arg2[%c0_1, %c0_2] : memref<8x128xf32, #tpu.memory_space<vmem>>, vector<8x128xf32>
    %cst = arith.constant dense<0xFF800000> : vector<8xf32>
    %2 = vector.multi_reduction <maximumf>, %0, %cst [1] : vector<8x128xf32> to vector<8xf32>
    %3 = vector.shape_cast %2 : vector<8xf32> to vector<8x1xf32>
    %4 = vector.broadcast %3 : vector<8x1xf32> to vector<8x128xf32>
    %5 = arith.subf %0, %4 : vector<8x128xf32>
    %cst_3 = arith.constant dense<0xFF800000> : vector<8xf32>
    %6 = vector.multi_reduction <maximumf>, %1, %cst_3 [1] : vector<8x128xf32> to vector<8xf32>
    %7 = vector.shape_cast %6 : vector<8xf32> to vector<8x1xf32>
    %8 = vector.broadcast %7 : vector<8x1xf32> to vector<8x128xf32>
    %9 = arith.subf %1, %8 : vector<8x128xf32>
    %cst_4 = arith.constant 2.000000e+00 : f32
    %10 = vector.broadcast %cst_4 : f32 to vector<8x128xf32>
    %11 = arith.mulf %10, %9 : vector<8x128xf32>
    %12 = math.exp %5 : vector<8x128xf32>
    %13 = math.exp %11 : vector<8x128xf32>
    %cst_5 = arith.constant dense<0.000000e+00> : vector<8xf32>
    %14 = vector.multi_reduction <add>, %12, %cst_5 [1] : vector<8x128xf32> to vector<8xf32>
    %15 = vector.shape_cast %14 : vector<8xf32> to vector<8x1xf32>
    %cst_6 = arith.constant dense<0.000000e+00> : vector<8xf32>
    %16 = vector.multi_reduction <add>, %13, %cst_6 [1] : vector<8x128xf32> to vector<8xf32>
    %17 = vector.shape_cast %16 : vector<8xf32> to vector<8x1xf32>
    %18 = tpu.reciprocal %17 : vector<8x1xf32> -> vector<8x1xf32>
    %19 = vector.broadcast %18 : vector<8x1xf32> to vector<8x128xf32>
    %20 = arith.mulf %13, %19 : vector<8x128xf32>
    %21 = tpu.reciprocal %15 : vector<8x1xf32> -> vector<8x1xf32>
    %22 = vector.broadcast %21 : vector<8x1xf32> to vector<8x128xf32>
    %23 = arith.mulf %12, %22 : vector<8x128xf32>
    %24 = math.sqrt %20 : vector<8x128xf32>
    %25 = math.sqrt %23 : vector<8x128xf32>
    %26 = arith.mulf %20, %20 : vector<8x128xf32>
    %27 = arith.mulf %26, %24 : vector<8x128xf32>
    %cst_7 = arith.constant dense<0.000000e+00> : vector<8xf32>
    %28 = vector.multi_reduction <add>, %27, %cst_7 [1] : vector<8x128xf32> to vector<8xf32>
    %29 = vector.shape_cast %28 : vector<8xf32> to vector<8x1xf32>
    %cst_8 = arith.constant 8.000000e-01 : f32
    %30 = vector.broadcast %cst_8 : f32 to vector<8x1xf32>
    %31 = arith.mulf %30, %29 : vector<8x1xf32>
    %32 = arith.mulf %23, %23 : vector<8x128xf32>
    %33 = arith.mulf %32, %25 : vector<8x128xf32>
    %cst_9 = arith.constant dense<0.000000e+00> : vector<8xf32>
    %34 = vector.multi_reduction <add>, %33, %cst_9 [1] : vector<8x128xf32> to vector<8xf32>
    %35 = vector.shape_cast %34 : vector<8xf32> to vector<8x1xf32>
    %cst_10 = arith.constant 2.000000e-01 : f32
    %36 = vector.broadcast %cst_10 : f32 to vector<8x1xf32>
    %37 = arith.mulf %36, %35 : vector<8x1xf32>
    %38 = arith.mulf %20, %20 : vector<8x128xf32>
    %39 = arith.mulf %38, %25 : vector<8x128xf32>
    %cst_11 = arith.constant dense<0.000000e+00> : vector<8xf32>
    %40 = vector.multi_reduction <add>, %39, %cst_11 [1] : vector<8x128xf32> to vector<8xf32>
    %41 = vector.shape_cast %40 : vector<8xf32> to vector<8x1xf32>
    %cst_12 = arith.constant -1.000000e+00 : f32
    %42 = vector.broadcast %cst_12 : f32 to vector<8x1xf32>
    %43 = arith.mulf %42, %41 : vector<8x1xf32>
    %44 = arith.addf %31, %37 : vector<8x1xf32>
    %45 = arith.addf %44, %43 : vector<8x1xf32>
    %cst_13 = arith.constant dense<0.000000e+00> : vector<1xf32>
    %46 = vector.multi_reduction <add>, %45, %cst_13 [0] : vector<8x1xf32> to vector<1xf32>
    %47 = vector.shape_cast %46 : vector<1xf32> to vector<1x1xf32>
    %48 = vector.shape_cast %47 : vector<1x1xf32> to vector<1x1xf32>
    %49 = vector.broadcast %48 : vector<1x1xf32> to vector<1x128xf32>
    %c0_14 = arith.constant 0 : index
    %c0_15 = arith.constant 0 : index
    %50 = vector.load %arg3[%c0_14, %c0_15] : memref<1x128xf32, #tpu.memory_space<vmem>>, vector<1x128xf32>
    tpu.vector_store %arg3[%c0_14, %c0_15], %49 {strides = array<i32>} : memref<1x128xf32, #tpu.memory_space<vmem>>, vector<1x128xf32>,
    return
  }
  func.func @transform_0(%arg0: i32) -> (i32, i32) {
    %c0_i32 = arith.constant 0 : i32
    %c0_i32_0 = arith.constant 0 : i32
    return %arg0, %c0_i32 : i32, i32
  }
  func.func @transform_1(%arg0: i32) -> (i32, i32) {
    %c0_i32 = arith.constant 0 : i32
    %c0_i32_0 = arith.constant 0 : i32
    return %arg0, %c0_i32 : i32, i32
  }
  func.func @transform_2(%arg0: i32) -> (i32, i32) {
    %c0_i32 = arith.constant 0 : i32
    %c0_i32_0 = arith.constant 0 : i32
    return %arg0, %c0_i32 : i32, i32
  }
}

</mosaic_0001>

<llo_original>
// kernel: tpu_custom_call.1
$region0: #{tpu_custom_call.1}
  #allocation0 [shape = 'u32[]', space=smem, size = 0x4, offset = 0x4, fixed_abs, tag = 'smem constant byte address 0x4 - core index']
  #allocation1 [shape = 'u32[144,128]{1,0:T(1,128)}', space=vmem, size = 0x12000, scoped, tag = 'internal scratch']
  %s0 = inlined_call_operand.hbm [shape: f32[8,128], index: 0, kind: input, shape index: {}]
  %s1 = inlined_call_operand.hbm [shape: f32[8,128], index: 1, kind: input, shape index: {}]
  %s2 = inlined_call_operand.hbm [shape: f32[1,128], index: 2, kind: output, shape index: {}]
  %s3 = sld [smem:[#allocation0]]
  $region26: #{tpu_custom_call.1} parent=0
    _
  %s5 = ssub.s32 1, %s3
  %s6 = scalar_select 0, %s5, %s3
  $region1: #{tpu_custom_call.1} parent=0
    #allocation2 [shape = 'u8[4096]{0}', space=vmem, size = 0x1000, scoped, tag = 'input window, operand 0, single buffered']
    #allocation3 [shape = 's32[1]{0}', space=sflag, size = 0x4, scoped, tag = 'scoped memory for tpu_custom_call.1']
    #allocation4 [shape = 's32[1]{0}', space=sflag, size = 0x4, scoped, tag = 'scoped memory for tpu_custom_call.1']
    #allocation5 [shape = 'u8[4096]{0}', space=vmem, size = 0x1000, scoped, tag = 'input window, operand 1, single buffered']
    #allocation6 [shape = 's32[1]{0}', space=sflag, size = 0x4, scoped, tag = 'scoped memory for tpu_custom_call.1']
    #allocation7 [shape = 'u8[512]{0}', space=vmem, size = 0x400, scoped, tag = 'output window, operand 0, single buffered']
    %7 = vsyncpa [#allocation3], 0
    %8 = vsyncpa [#allocation6], 0
    %9 = vsyncpa [#allocation4], 0
    // Predicated region
    $region2: #{tpu_custom_call.1} parent=1 // pred_check
      _
    $region3: #{tpu_custom_call.1} parent=1 // pred_check_branch
      %11 = sbr.rel (0) target = $region5
    $region4: #{tpu_custom_call.1} parent=1 // pred_region
      %s13 = ssub.s32 128, 128
      %14 = vsyncadd [#allocation3], %s13
      %s16 = sshll.u32 [#allocation2], 4
      %s17 = int_to_ptr.vmem [resolvable:$true] %s16
      %19 = dma.hbm_to_vmem [thread:$0]  %s0, 128, %s17, [#allocation3]
    $region5: #{tpu_custom_call.1} parent=1 // pred_fallthru
      _
    // Predicated region
    $region6: #{tpu_custom_call.1} parent=1 // pred_check
      _
    $region7: #{tpu_custom_call.1} parent=1 // pred_check_branch
      %21 = sbr.rel (0) target = $region9
    $region8: #{tpu_custom_call.1} parent=1 // pred_region
      %s23 = ssub.s32 128, 128
      %24 = vsyncadd [#allocation6], %s23
      %s26 = sshll.u32 [#allocation5], 4
      %s27 = int_to_ptr.vmem [resolvable:$true] %s26
      %29 = dma.hbm_to_vmem [thread:$0]  %s1, 128, %s27, [#allocation6]
    $region9: #{tpu_custom_call.1} parent=1 // pred_fallthru
      _
    // Predicated region
    $region10: #{tpu_custom_call.1} parent=1 // pred_check
      _
    $region11: #{tpu_custom_call.1} parent=1 // pred_check_branch
      %31 = sbr.rel (0) target = $region13
    $region12: #{tpu_custom_call.1} parent=1 // pred_region
      %32 = dma.done [#allocation3], 128
    $region13: #{tpu_custom_call.1} parent=1 // pred_fallthru
      _
    // Predicated region
    $region14: #{tpu_custom_call.1} parent=1 // pred_check
      _
    $region15: #{tpu_custom_call.1} parent=1 // pred_check_branch
      %34 = sbr.rel (0) target = $region17
    $region16: #{tpu_custom_call.1} parent=1 // pred_region
      %35 = dma.done [#allocation6], 128
    $region17: #{tpu_custom_call.1} parent=1 // pred_fallthru
      _
    %v36 = vld [vmem:[#allocation2] sm:$0xff]
    %v37 = vld [vmem:[#allocation5] sm:$0xff]
    %38 = vmax.xlane.f32.xlu0 %v36
    %v39 = vpop.xlane.xlu0 %38
    %v40 = vsub.f32 %v36, %v39
    %41 = vmax.xlane.f32.xlu0 %v37
    %v42 = vpop.xlane.xlu0 %41
    %v43 = vsub.f32 %v37, %v42
    %v44 = vmul.f32 %v43, 2.0
    %v45 = vmul.f32 %v40, 1.442695
    %v46 = vpow.pop %v45
    %v47 = vmul.f32 %v44, 1.442695
    %v48 = vpow.pop %v47
    %49 = vadd.xlane.f32.xlu0 %v46
    %v50 = vpop.xlane.xlu0 %49
    %51 = vadd.xlane.f32.xlu0 %v48
    %v52 = vpop.xlane.xlu0 %51
    %v53 = vrcp.pop %v52
    %v54 = vmul.f32 %v48, %v53
    %v55 = vrcp.pop %v50
    %v56 = vmul.f32 %v46, %v55
    %v57 = vrsqrt.pop %v54
    %v58 = vmul.f32 %v54, %v57
    %vm59 = vcmp.eq.f32.partialorder %v54, inf
    %v60 = vsel %vm59, %v54, %v58
    %vm61 = vcmp.eq.f32.partialorder %v54, 0.0
    %v62 = vand.u32 %v54, 2147483648
    %v63 = vsel %vm61, %v62, %v60
    %v64 = vrsqrt.pop %v56
    %v65 = vmul.f32 %v56, %v64
    %vm66 = vcmp.eq.f32.partialorder %v56, inf
    %v67 = vsel %vm66, %v56, %v65
    %vm68 = vcmp.eq.f32.partialorder %v56, 0.0
    %v69 = vand.u32 %v56, 2147483648
    %v70 = vsel %vm68, %v69, %v67
    %v71 = vmul.f32 %v54, %v54
    %v72 = vmul.f32 %v71, %v63
    %73 = vadd.xlane.f32.xlu0 %v72
    %v74 = vpop.xlane.xlu0 %73
    %v75 = vmul.f32 %v74, 0.8
    %v76 = vmul.f32 %v56, %v56
    %v77 = vmul.f32 %v76, %v70
    %78 = vadd.xlane.f32.xlu0 %v77
    %v79 = vpop.xlane.xlu0 %78
    %v80 = vmul.f32 %v79, 0.2
    %v81 = vmul.f32 %v71, %v70
    %82 = vadd.xlane.f32.xlu0 %v81
    %v83 = vpop.xlane.xlu0 %82
    %v84 = vmul.f32 %v83, -1.0
    %v85 = vadd.f32 %v75, %v80
    %v86 = vadd.f32 %v85, %v84
    %v87 = vrot.slane %v86, 4
    %v88 = vadd.f32 %v86, %v87
    %v89 = vrot.slane %v88, 2
    %v90 = vadd.f32 %v88, %v89
    %v91 = vrot.slane %v90, 1
    %v92 = vadd.f32 %v90, %v91
    %93 = vst [vmem:[#allocation7] sm:$0x1] %v92
    // Predicated region
    $region18: #{tpu_custom_call.1} parent=1 // pred_check
      _
    $region19: #{tpu_custom_call.1} parent=1 // pred_check_branch
      %95 = sbr.rel (0) target = $region21
    $region20: #{tpu_custom_call.1} parent=1 // pred_region
      %s97 = ssub.s32 16, 16
      %98 = vsyncadd [#allocation4], %s97
      %s100 = sshll.u32 [#allocation7], 4
      %s101 = int_to_ptr.vmem [resolvable:$true] %s100
      %103 = dma.vmem_to_hbm [thread:$0]  %s101, 16, %s2, [#allocation4]
    $region21: #{tpu_custom_call.1} parent=1 // pred_fallthru
      _
    // Predicated region
    $region22: #{tpu_custom_call.1} parent=1 // pred_check
      _
    $region23: #{tpu_custom_call.1} parent=1 // pred_check_branch
      %105 = sbr.rel (0) target = $region25
    $region24: #{tpu_custom_call.1} parent=1 // pred_region
      %106 = dma.done [#allocation4], 16
    $region25: #{tpu_custom_call.1} parent=1 // pred_fallthru
      _
    %107 = vsyncpa [#allocation3], 1
    %108 = vsyncpa [#allocation6], 1
    %109 = vsyncpa [#allocation4], 1

</llo_original>
